<compile_context>
chip_gen: v6e
topology: v6e:2x2x1
jax: 0.10.0
libtpu: 0.0.40
codegen_flags: <defaults>
</compile_context>

<pallas_src>
import functools

import jax
import jax.numpy as jnp
from jax.experimental import pallas as pl
from jax.experimental.pallas import tpu as pltpu


def _round_up(x, m):
    return ((x + m - 1) // m) * m


# ----------------------------- Pallas kernel -------------------------------

def _disc_kernel(k_max, time_chunk, x_ref, w_ref, b_ref, mask_ref,
                 fcw_ref, fcb_ref, out_ref):
    """Fused text-CNN forward for one batch tile.

    x_ref   : (B_tile, S_pad, E)      bf16 (time zero-padded)
    w_ref   : (k_max*E, F_pad)        bf16 (taps zero-padded, filters concat, lanes padded)
    b_ref   : (1, F_pad)              f32  conv biases
    mask_ref: (L_pad, F_pad)          f32  additive mask (0 valid, -1e30 invalid)
    fcw_ref : (F_pad, OUT_pad)        f32
    fcb_ref : (1, OUT_pad)            f32
    out_ref : (B_tile, OUT_pad)       f32
    """
    x = x_ref[...]                          # (Bt, S_pad, E) bf16
    bt, _, e = x.shape
    w = w_ref[...]                          # (k_max*E, F_pad) bf16
    f_pad = w.shape[-1]
    bias3 = b_ref[...][None, :, :]          # (1, 1, F_pad)  -- hoisted out of the loop
    l_pad = mask_ref.shape[0]
    n_chunks = l_pad // time_chunk

    pooled = jnp.full((bt, f_pad), -jnp.inf, jnp.float32)
    for c in range(n_chunks):
        t0 = c * time_chunk
        # im2col slab: one MXU matmul covers all taps and all filter sizes.
        slab = jnp.concatenate(
            [x[:, t0 + j:t0 + j + time_chunk, :] for j in range(k_max)],
            axis=-1).reshape(bt * time_chunk, k_max * e)
        acc = jnp.dot(slab, w, preferred_element_type=jnp.float32)
        acc = acc.reshape(bt, time_chunk, f_pad) + bias3
        acc = jnp.where(acc >= 0, acc, 0.01 * acc)                 # leaky_relu(0.01)
        acc = acc + mask_ref[t0:t0 + time_chunk, :][None, :, :]    # mask invalid steps
        pooled = jnp.maximum(pooled, jnp.max(acc, axis=1))         # running time-max

    # dropout is identity at inference  # TODO(synk): training-mode dropout (p=0.5)
    logits = jnp.dot(pooled, fcw_ref[...],
                     preferred_element_type=jnp.float32) + fcb_ref[...]
    out_ref[...] = jax.nn.sigmoid(logits).astype(out_ref.dtype)


# ------------------------------- wrapper ------------------------------------

def discriminator_forward(x_nchw, params, filter_sizes):
    """x_nchw: (B, 1, S, E) float32.  Returns (B, output_size) float32."""
    filter_sizes = tuple(int(k) for k in filter_sizes)
    x = x_nchw[:, 0, :, :].astype(jnp.float32)               # (B, S, E)
    B, S, E = x.shape
    n_fs = len(filter_sizes)
    F = params["convs"][0][0].shape[-1]
    out_size = params["fc_w"].shape[1]

    k_max = max(filter_sizes)
    k_min = min(filter_sizes)
    F_real = n_fs * F
    F_pad = _round_up(F_real, 128)                            # lane-dense feature axis
    KE = k_max * E
    OUT_pad = _round_up(out_size, 128)                        # lane-dense output

    L_pool = S - k_min + 1                                    # most pooling positions
    time_chunk = min(128, _round_up(L_pool, 8))
    L_pad = _round_up(L_pool, time_chunk)
    S_pad = L_pad + k_max - 1

    # --- fused conv weights: zero-pad taps to k_max, concat filters, pad lanes ---
    w_all = jnp.zeros((k_max, E, F_pad), jnp.float32)
    b_all = jnp.zeros((1, F_pad), jnp.float32)
    for idx, ((w, b), k) in enumerate(zip(params["convs"], filter_sizes)):
        w_all = w_all.at[:k, :, idx * F:(idx + 1) * F].set(w.astype(jnp.float32))
        b_all = b_all.at[:, idx * F:(idx + 1) * F].set(
            b.astype(jnp.float32).reshape(1, F))
    w_all = w_all.reshape(KE, F_pad).astype(jnp.bfloat16)

    # --- additive mask: invalid trailing time steps per filter size -> -1e30 ---
    NEG = jnp.float32(-1e30)
    t_idx = jnp.arange(L_pad, dtype=jnp.int32)[:, None]
    mask = jnp.zeros((L_pad, F_pad), jnp.float32)
    for idx, k in enumerate(filter_sizes):
        col = jnp.where(t_idx < (S - k + 1), jnp.float32(0.0), NEG)
        mask = mask.at[:, idx * F:(idx + 1) * F].set(
            jnp.broadcast_to(col, (L_pad, F)))

    # --- padded FC weights (zero rows for the padded feature lanes) ---
    fc_w_pad = jnp.zeros((F_pad, OUT_pad), jnp.float32)
    fc_w_pad = fc_w_pad.at[:F_real, :out_size].set(params["fc_w"].astype(jnp.float32))
    fc_b_pad = jnp.zeros((1, OUT_pad), jnp.float32)
    fc_b_pad = fc_b_pad.at[:, :out_size].set(
        params["fc_b"].astype(jnp.float32).reshape(1, out_size))

    # --- batch tile sized against the smallest (v7x, 64 MiB) VMEM budget ---
    budget = 16 * 1024 * 1024
    b_tile = 128 if B >= 128 else _round_up(B, 8)
    while b_tile > 8:
        need = (2 * b_tile * S_pad * E * 2                    # double-buffered bf16 x block
                + 2 * b_tile * time_chunk * F_pad * 4         # im2col slab + f32 acc chunk
                + b_tile * F_pad * 4                          # pooled features
                + KE * F_pad * 2                              # W_all
                + (L_pad + 2) * F_pad * 4                     # mask + biases
                + F_pad * OUT_pad * 4)                        # fc weights
        if need <= budget:
            break
        b_tile //= 2
    b_tile = max(b_tile, 8)
    B_pad = _round_up(B, b_tile)

    x_p = jnp.pad(x, ((0, B_pad - B), (0, S_pad - S), (0, 0))).astype(jnp.bfloat16)

    grid = (B_pad // b_tile,)
    kernel = functools.partial(_disc_kernel, k_max, time_chunk)

    flops = 2 * B_pad * L_pad * KE * F_pad + 2 * B_pad * F_pad * OUT_pad
    bytes_accessed = (x_p.size * 2 + w_all.size * 2
                      + (b_all.size + mask.size + fc_w_pad.size + fc_b_pad.size) * 4
                      + B_pad * OUT_pad * 4)

    out = pl.pallas_call(
        kernel,
        out_shape=jax.ShapeDtypeStruct((B_pad, OUT_pad), jnp.float32),
        grid=grid,
        in_specs=[
            pl.BlockSpec((b_tile, S_pad, E), lambda i: (i, 0, 0)),
            pl.BlockSpec((KE, F_pad), lambda i: (0, 0)),
            pl.BlockSpec((1, F_pad), lambda i: (0, 0)),
            pl.BlockSpec((L_pad, F_pad), lambda i: (0, 0)),
            pl.BlockSpec((F_pad, OUT_pad), lambda i: (0, 0)),
            pl.BlockSpec((1, OUT_pad), lambda i: (0, 0)),
        ],
        out_specs=pl.BlockSpec((b_tile, OUT_pad), lambda i: (i, 0)),
        compiler_params=pltpu.CompilerParams(
            dimension_semantics=("parallel",),
            vmem_limit_bytes=64 * 1024 * 1024,
        ),
        cost_estimate=pl.CostEstimate(
            flops=flops,
            transcendentals=B_pad * OUT_pad,
            bytes_accessed=bytes_accessed),
    )(x_p, w_all, b_all, mask, fc_w_pad, fc_b_pad)

    return out[:B, :out_size]


# ---------------------------- pure-JAX reference ----------------------------

def reference_forward(x_nchw, params, filter_sizes):
    x = x_nchw[:, 0, :, :]                                    # (B, S, E)
    B, S, E = x.shape
    feats = []
    for (w, b), k in zip(params["convs"], filter_sizes):
        L = S - k + 1
        acc = jnp.zeros((B, L, w.shape[-1]), jnp.float32)
        for j in range(k):
            acc = acc + jnp.einsum("ble,ef->blf", x[:, j:j + L, :], w[j])
        acc = acc + b[None, :, :]
        acc = jnp.where(acc >= 0, acc, 0.01 * acc)
        feats.append(jnp.max(acc, axis=1))
    h = jnp.concatenate(feats, axis=-1)
    return jax.nn.sigmoid(h @ params["fc_w"] + params["fc_b"])


# --------------------------------- main --------------------------------------

if __name__ == "__main__":
    # Small, deterministic configuration.
    B, S, E = 2, 16, 32          # batch, sentence length, embedding size
    filter_sizes = [3, 4, 5]     # args.filter_sizes = "3,4,5"
    n_filters = 8                # args.n_filters
    output_size = 2

    key = jax.random.PRNGKey(0)
    keys = jax.random.split(key, 2 * len(filter_sizes) + 3)

    convs = []
    for i, k in enumerate(filter_sizes):
        w = 0.1 * jax.random.normal(keys[2 * i], (k, E, n_filters), jnp.float32)
        b = 0.1 * jax.random.normal(keys[2 * i + 1], (1, n_filters), jnp.float32)
        convs.append((w, b))

    in_fc = len(filter_sizes) * n_filters
    fc_w = 0.1 * jax.random.normal(keys[-3], (in_fc, output_size), jnp.float32)
    fc_b = 0.1 * jax.random.normal(keys[-2], (1, output_size), jnp.float32)
    params = {"convs": convs, "fc_w": fc_w, "fc_b": fc_b}

    x = jax.random.normal(keys[-1], (B, 1, S, E), jnp.float32)   # NCHW input

    y = discriminator_forward(x, params, filter_sizes)
    y = jax.block_until_ready(y)

    y_ref = reference_forward(x, params, filter_sizes)
    # bf16 matmul inputs (f32 accumulation) vs. f32 reference -> relaxed tolerance.
    if not bool(jnp.allclose(y, y_ref, atol=2e-2, rtol=2e-2)):
        raise AssertionError("Pallas kernel mismatch vs. JAX reference")

    print("KERNEL_OK")
</pallas_src>

<mosaic_0001>
module attributes {stable_mosaic.version = 11 : i64} {
  func.func @_disc_kernel(%arg0: i32, %arg1: memref<8x20x32xbf16, #tpu.memory_space<vmem>>, %arg2: memref<160x128xbf16, #tpu.memory_space<vmem>>, %arg3: memref<1x128xf32, #tpu.memory_space<vmem>>, %arg4: memref<16x128xf32, #tpu.memory_space<vmem>>, %arg5: memref<128x128xf32, #tpu.memory_space<vmem>>, %arg6: memref<1x128xf32, #tpu.memory_space<vmem>>, %arg7: memref<8x128xf32, #tpu.memory_space<vmem>>) attributes {dimension_semantics = [#tpu.dimension_semantics<parallel>], iteration_bounds = array<i64: 1>, scalar_prefetch = 0 : i64, scratch_operands = 0 : i64, tpu.core_type = #tpu.core_type<tc>, window_params = [{transform_indices = @transform_0, window_bounds = array<i64: 8, 20, 32>}, {pipeline_mode = #tpu.pipeline_mode<synchronous>, transform_indices = @transform_1, window_bounds = array<i64: 160, 128>}, {pipeline_mode = #tpu.pipeline_mode<synchronous>, transform_indices = @transform_2, window_bounds = array<i64: 1, 128>}, {pipeline_mode = #tpu.pipeline_mode<synchronous>, transform_indices = @transform_3, window_bounds = array<i64: 16, 128>}, {pipeline_mode = #tpu.pipeline_mode<synchronous>, transform_indices = @transform_4, window_bounds = array<i64: 128, 128>}, {pipeline_mode = #tpu.pipeline_mode<synchronous>, transform_indices = @transform_5, window_bounds = array<i64: 1, 128>}, {transform_indices = @transform_6, window_bounds = array<i64: 8, 128>}]} {
    %c0 = arith.constant 0 : index
    %c0_0 = arith.constant 0 : index
    %c0_1 = arith.constant 0 : index
    %0 = vector.load %arg1[%c0, %c0_0, %c0_1] : memref<8x20x32xbf16, #tpu.memory_space<vmem>>, vector<8x20x32xbf16>
    %c0_2 = arith.constant 0 : index
    %c0_3 = arith.constant 0 : index
    %1 = vector.load %arg2[%c0_2, %c0_3] : memref<160x128xbf16, #tpu.memory_space<vmem>>, vector<160x128xbf16>
    %c0_4 = arith.constant 0 : index
    %c0_5 = arith.constant 0 : index
    %2 = vector.load %arg3[%c0_4, %c0_5] : memref<1x128xf32, #tpu.memory_space<vmem>>, vector<1x128xf32>
    %3 = vector.shape_cast %2 : vector<1x128xf32> to vector<1x1x128xf32>
    %cst = arith.constant 0xFF800000 : f32
    %4 = vector.broadcast %cst : f32 to vector<8x128xf32>
    %5 = vector.extract_strided_slice %0 {offsets = [0, 0, 0], sizes = [8, 16, 32], strides = [1, 1, 1]} : vector<8x20x32xbf16> to vector<8x16x32xbf16>
    %6 = vector.extract_strided_slice %0 {offsets = [0, 1, 0], sizes = [8, 16, 32], strides = [1, 1, 1]} : vector<8x20x32xbf16> to vector<8x16x32xbf16>
    %7 = vector.extract_strided_slice %0 {offsets = [0, 2, 0], sizes = [8, 16, 32], strides = [1, 1, 1]} : vector<8x20x32xbf16> to vector<8x16x32xbf16>
    %8 = vector.extract_strided_slice %0 {offsets = [0, 3, 0], sizes = [8, 16, 32], strides = [1, 1, 1]} : vector<8x20x32xbf16> to vector<8x16x32xbf16>
    %9 = vector.extract_strided_slice %0 {offsets = [0, 4, 0], sizes = [8, 16, 32], strides = [1, 1, 1]} : vector<8x20x32xbf16> to vector<8x16x32xbf16>
    %10 = tpu.concatenate %5, %6, %7, %8, %9 in 2 : vector<8x16x32xbf16>, vector<8x16x32xbf16>, vector<8x16x32xbf16>, vector<8x16x32xbf16>, vector<8x16x32xbf16> -> vector<8x16x160xbf16>
    %11 = vector.shape_cast %10 : vector<8x16x160xbf16> to vector<128x160xbf16>
    %cst_6 = arith.constant dense<0.000000e+00> : vector<128x128xf32>
    %12 = tpu.matmul %11, %1, %cst_6 {dimension_numbers = #tpu.dot_dimension_numbers<[1], [0], [0], [1], [0, 0, 1, 1], [], []>} : vector<128x160xbf16>, vector<160x128xbf16>, vector<128x128xf32> -> vector<128x128xf32>
    %13 = vector.shape_cast %12 : vector<128x128xf32> to vector<8x16x128xf32>
    %14 = vector.broadcast %3 : vector<1x1x128xf32> to vector<8x16x128xf32>
    %15 = arith.addf %13, %14 : vector<8x16x128xf32>
    %cst_7 = arith.constant 0.000000e+00 : f32
    %16 = vector.broadcast %cst_7 : f32 to vector<8x16x128xf32>
    %17 = arith.cmpf oge, %15, %16 : vector<8x16x128xf32>
    %cst_8 = arith.constant 0.00999999977 : f32
    %18 = vector.broadcast %cst_8 : f32 to vector<8x16x128xf32>
    %19 = arith.mulf %18, %15 : vector<8x16x128xf32>
    %20 = arith.select %17, %15, %19 : vector<8x16x128xi1>, vector<8x16x128xf32>
    %c0_9 = arith.constant 0 : index
    %c0_10 = arith.constant 0 : index
    %21 = vector.load %arg4[%c0_9, %c0_10] : memref<16x128xf32, #tpu.memory_space<vmem>>, vector<16x128xf32>
    %22 = vector.shape_cast %21 : vector<16x128xf32> to vector<1x16x128xf32>
    %23 = vector.broadcast %22 : vector<1x16x128xf32> to vector<8x16x128xf32>
    %24 = arith.addf %20, %23 : vector<8x16x128xf32>
    %cst_11 = arith.constant dense<0xFF800000> : vector<8x128xf32>
    %25 = vector.multi_reduction <maximumf>, %24, %cst_11 [1] : vector<8x16x128xf32> to vector<8x128xf32>
    %26 = arith.maximumf %4, %25 : vector<8x128xf32>
    %c0_12 = arith.constant 0 : index
    %c0_13 = arith.constant 0 : index
    %27 = vector.load %arg5[%c0_12, %c0_13] : memref<128x128xf32, #tpu.memory_space<vmem>>, vector<128x128xf32>
    %cst_14 = arith.constant dense<0.000000e+00> : vector<8x128xf32>
    %28 = tpu.matmul %26, %27, %cst_14 {dimension_numbers = #tpu.dot_dimension_numbers<[1], [0], [0], [1], [0, 0, 1, 1], [], []>} : vector<8x128xf32>, vector<128x128xf32>, vector<8x128xf32> -> vector<8x128xf32>
    %c0_15 = arith.constant 0 : index
    %c0_16 = arith.constant 0 : index
    %29 = vector.load %arg6[%c0_15, %c0_16] : memref<1x128xf32, #tpu.memory_space<vmem>>, vector<1x128xf32>
    %30 = vector.broadcast %29 : vector<1x128xf32> to vector<8x128xf32>
    %31 = arith.addf %28, %30 : vector<8x128xf32>
    %32 = arith.negf %31 : vector<8x128xf32>
    %33 = math.exp %32 : vector<8x128xf32>
    %cst_17 = arith.constant 1.000000e+00 : f32
    %34 = vector.broadcast %cst_17 : f32 to vector<8x128xf32>
    %35 = arith.addf %34, %33 : vector<8x128xf32>
    %36 = arith.divf %34, %35 : vector<8x128xf32>
    %c0_18 = arith.constant 0 : index
    %c0_19 = arith.constant 0 : index
    %37 = vector.load %arg7[%c0_18, %c0_19] : memref<8x128xf32, #tpu.memory_space<vmem>>, vector<8x128xf32>
    tpu.vector_store %arg7[%c0_18, %c0_19], %36 {strides = array<i32>} : memref<8x128xf32, #tpu.memory_space<vmem>>, vector<8x128xf32>,
    return
  }
  func.func @transform_0(%arg0: i32) -> (i32, i32, i32) {
    %c0_i32 = arith.constant 0 : i32
    %c0_i32_0 = arith.constant 0 : i32
    %c0_i32_1 = arith.constant 0 : i32
    return %arg0, %c0_i32, %c0_i32_0 : i32, i32, i32
  }
  func.func @transform_1(%arg0: i32) -> (i32, i32) {
    %c0_i32 = arith.constant 0 : i32
    %c0_i32_0 = arith.constant 0 : i32
    %c0_i32_1 = arith.constant 0 : i32
    return %c0_i32, %c0_i32_0 : i32, i32
  }
  func.func @transform_2(%arg0: i32) -> (i32, i32) {
    %c0_i32 = arith.constant 0 : i32
    %c0_i32_0 = arith.constant 0 : i32
    %c0_i32_1 = arith.constant 0 : i32
    return %c0_i32, %c0_i32_0 : i32, i32
  }
  func.func @transform_3(%arg0: i32) -> (i32, i32) {
    %c0_i32 = arith.constant 0 : i32
    %c0_i32_0 = arith.constant 0 : i32
    %c0_i32_1 = arith.constant 0 : i32
    return %c0_i32, %c0_i32_0 : i32, i32
  }
  func.func @transform_4(%arg0: i32) -> (i32, i32) {
    %c0_i32 = arith.constant 0 : i32
    %c0_i32_0 = arith.constant 0 : i32
    %c0_i32_1 = arith.constant 0 : i32
    return %c0_i32, %c0_i32_0 : i32, i32
  }
  func.func @transform_5(%arg0: i32) -> (i32, i32) {
    %c0_i32 = arith.constant 0 : i32
    %c0_i32_0 = arith.constant 0 : i32
    %c0_i32_1 = arith.constant 0 : i32
    return %c0_i32, %c0_i32_0 : i32, i32
  }
  func.func @transform_6(%arg0: i32) -> (i32, i32) {
    %c0_i32 = arith.constant 0 : i32
    %c0_i32_0 = arith.constant 0 : i32
    return %arg0, %c0_i32 : i32, i32
  }
}

</mosaic_0001>

<llo_original>
// kernel: tpu_custom_call.1
$region0: #{tpu_custom_call.1}
  #allocation0 [shape = 'u32[]', space=smem, size = 0x4, offset = 0x4, fixed_abs, tag = 'smem constant byte address 0x4 - core index']
  #allocation1 [shape = 'u32[144,128]{1,0:T(1,128)}', space=vmem, size = 0x12000, scoped, tag = 'internal scratch']
  %s0 = inlined_call_operand.vmem [shape: bf16[8,20,32], index: 0, kind: input, shape index: {}]
  %s1 = inlined_call_operand.hbm [shape: bf16[160,128], index: 1, kind: input, shape index: {}]
  %s2 = inlined_call_operand.vmem [shape: f32[1,128], index: 2, kind: input, shape index: {}]
  %s3 = inlined_call_operand.vmem [shape: f32[16,128], index: 3, kind: input, shape index: {}]
  %s4 = inlined_call_operand.vmem [shape: f32[128,128], index: 4, kind: input, shape index: {}]
  %s5 = inlined_call_operand.vmem [shape: f32[1,128], index: 5, kind: input, shape index: {}]
  %s6 = inlined_call_operand.hbm [shape: f32[8,128], index: 6, kind: output, shape index: {}]
  %s7 = sld [smem:[#allocation0]]
  $region38: #{tpu_custom_call.1} parent=0
    _
  %s9 = ssub.s32 1, %s7
  %s10 = scalar_select 0, %s9, %s7
  $region1: #{tpu_custom_call.1} parent=0
    #allocation2 [shape = 'u8[40960]{0}', space=vmem, size = 0xa000, scoped, tag = 'input window, operand 1, single buffered']
    #allocation3 [shape = 's32[1]{0}', space=sflag, size = 0x4, scoped, tag = 'scoped memory for tpu_custom_call.1']
    #allocation4 [shape = 's32[1]{0}', space=sflag, size = 0x4, scoped, tag = 'scoped memory for tpu_custom_call.1']
    #allocation5 [shape = 'u8[4096]{0}', space=vmem, size = 0x1000, scoped, tag = 'output window, operand 0, single buffered']
    %11 = vsyncpa [#allocation3], 0
    %12 = vsyncpa [#allocation4], 0
    // Predicated region
    $region2: #{tpu_custom_call.1} parent=1 // pred_check
      _
    $region3: #{tpu_custom_call.1} parent=1 // pred_check_branch
      %14 = sbr.rel (0) target = $region5
    $region4: #{tpu_custom_call.1} parent=1 // pred_region
      _
    $region5: #{tpu_custom_call.1} parent=1 // pred_fallthru
      _
    // Predicated region
    $region6: #{tpu_custom_call.1} parent=1 // pred_check
      _
    $region7: #{tpu_custom_call.1} parent=1 // pred_check_branch
      %16 = sbr.rel (0) target = $region9
    $region8: #{tpu_custom_call.1} parent=1 // pred_region
      %s18 = ssub.s32 1280, 1280
      %19 = vsyncadd [#allocation3], %s18
      %s20 = sshll.u32 [#allocation2], 4
      %s21 = int_to_ptr.vmem [resolvable:$true] %s20
      %26 = dma.hbm_to_vmem [thread:$0]  %s1, 1280, %s21, [#allocation3], 64, 64, 4
    $region9: #{tpu_custom_call.1} parent=1 // pred_fallthru
      _
    // Predicated region
    $region10: #{tpu_custom_call.1} parent=1 // pred_check
      _
    $region11: #{tpu_custom_call.1} parent=1 // pred_check_branch
      %28 = sbr.rel (0) target = $region13
    $region12: #{tpu_custom_call.1} parent=1 // pred_region
      _
    $region13: #{tpu_custom_call.1} parent=1 // pred_fallthru
      _
    // Predicated region
    $region14: #{tpu_custom_call.1} parent=1 // pred_check
      _
    $region15: #{tpu_custom_call.1} parent=1 // pred_check_branch
      %30 = sbr.rel (0) target = $region17
    $region16: #{tpu_custom_call.1} parent=1 // pred_region
      _
    $region17: #{tpu_custom_call.1} parent=1 // pred_fallthru
      _
    // Predicated region
    $region18: #{tpu_custom_call.1} parent=1 // pred_check
      _
    $region19: #{tpu_custom_call.1} parent=1 // pred_check_branch
      %32 = sbr.rel (0) target = $region21
    $region20: #{tpu_custom_call.1} parent=1 // pred_region
      _
    $region21: #{tpu_custom_call.1} parent=1 // pred_fallthru
      _
    // Predicated region
    $region22: #{tpu_custom_call.1} parent=1 // pred_check
      _
    $region23: #{tpu_custom_call.1} parent=1 // pred_check_branch
      %34 = sbr.rel (0) target = $region25
    $region24: #{tpu_custom_call.1} parent=1 // pred_region
      _
    $region25: #{tpu_custom_call.1} parent=1 // pred_fallthru
      _
    // Predicated region
    $region26: #{tpu_custom_call.1} parent=1 // pred_check
      _
    $region27: #{tpu_custom_call.1} parent=1 // pred_check_branch
      %36 = sbr.rel (0) target = $region29
    $region28: #{tpu_custom_call.1} parent=1 // pred_region
      %37 = dma.done [#allocation3], 1280
    $region29: #{tpu_custom_call.1} parent=1 // pred_fallthru
      _
    %v39 = vld [vmem:[%s0] sm:$0xf]
    %v40 = vld [vmem:[%s0 + $0x4] sm:$0xf]
    %v41 = vld [vmem:[%s0 + $0x8] sm:$0x3]
    %v42 = vld [vmem:[%s0 + $0xc] sm:$0xf]
    %v43 = vld [vmem:[%s0 + $0x10] sm:$0xf]
    %v44 = vld [vmem:[%s0 + $0x14] sm:$0x3]
    %v45 = vld [vmem:[%s0 + $0x18] sm:$0xf]
    %v46 = vld [vmem:[%s0 + $0x1c] sm:$0xf]
    %v47 = vld [vmem:[%s0 + $0x20] sm:$0x3]
    %v48 = vld [vmem:[%s0 + $0x24] sm:$0xf]
    %v49 = vld [vmem:[%s0 + $0x28] sm:$0xf]
    %v50 = vld [vmem:[%s0 + $0x2c] sm:$0x3]
    %v51 = vld [vmem:[%s0 + $0x30] sm:$0xf]
    %v52 = vld [vmem:[%s0 + $0x34] sm:$0xf]
    %v53 = vld [vmem:[%s0 + $0x38] sm:$0x3]
    %v54 = vld [vmem:[%s0 + $0x3c] sm:$0xf]
    %v55 = vld [vmem:[%s0 + $0x40] sm:$0xf]
    %v56 = vld [vmem:[%s0 + $0x44] sm:$0x3]
    %v57 = vld [vmem:[%s0 + $0x48] sm:$0xf]
    %v58 = vld [vmem:[%s0 + $0x4c] sm:$0xf]
    %v59 = vld [vmem:[%s0 + $0x50] sm:$0x3]
    %v60 = vld [vmem:[%s0 + $0x54] sm:$0xf]
    %v61 = vld [vmem:[%s0 + $0x58] sm:$0xf]
    %v62 = vld [vmem:[%s0 + $0x5c] sm:$0x3]
    %v63 = vld [vmem:[#allocation2] sm:$0xf]
    %v64 = vld [vmem:[#allocation2 + $0x4] sm:$0xf]
    %v65 = vld [vmem:[#allocation2 + $0x8] sm:$0xf]
    %v66 = vld [vmem:[#allocation2 + $0xc] sm:$0xf]
    %v67 = vld [vmem:[#allocation2 + $0x10] sm:$0xf]
    %v68 = vld [vmem:[#allocation2 + $0x14] sm:$0xf]
    %v69 = vld [vmem:[#allocation2 + $0x18] sm:$0xf]
    %v70 = vld [vmem:[#allocation2 + $0x1c] sm:$0xf]
    %v71 = vld [vmem:[#allocation2 + $0x20] sm:$0xf]
    %v72 = vld [vmem:[#allocation2 + $0x24] sm:$0xf]
    %v73 = vld [vmem:[#allocation2 + $0x28] sm:$0xf]
    %v74 = vld [vmem:[#allocation2 + $0x2c] sm:$0xf]
    %v75 = vld [vmem:[#allocation2 + $0x30] sm:$0xf]
    %v76 = vld [vmem:[#allocation2 + $0x34] sm:$0xf]
    %v77 = vld [vmem:[#allocation2 + $0x38] sm:$0xf]
    %v78 = vld [vmem:[#allocation2 + $0x3c] sm:$0xf]
    %v79 = vld [vmem:[#allocation2 + $0x40] sm:$0xf]
    %v80 = vld [vmem:[#allocation2 + $0x44] sm:$0xf]
    %v81 = vld [vmem:[#allocation2 + $0x48] sm:$0xf]
    %v82 = vld [vmem:[#allocation2 + $0x4c] sm:$0xf]
    %v83 = vld [vmem:[%s2] sm:$0x1]
    %v100 = vunpack.c.l.b16 %v39
    %v101 = vunpack.c.l.b16 %v40
    %v102 = vunpack.c.l.b16 %v42
    %v103 = vunpack.c.l.b16 %v43
    %v104 = vunpack.c.l.b16 %v45
    %v105 = vunpack.c.l.b16 %v46
    %v106 = vunpack.c.l.b16 %v48
    %v107 = vunpack.c.l.b16 %v49
    %v108 = vunpack.c.l.b16 %v51
    %v109 = vunpack.c.l.b16 %v52
    %v110 = vunpack.c.l.b16 %v54
    %v111 = vunpack.c.l.b16 %v55
    %v112 = vunpack.c.l.b16 %v57
    %v113 = vunpack.c.l.b16 %v58
    %v114 = vunpack.c.l.b16 %v60
    %v115 = vunpack.c.l.b16 %v61
    %v116 = vpack.c.b16 %v101, %v100
    %v117 = vpack.c.b16 %v103, %v102
    %v118 = vpack.c.b16 %v105, %v104
    %v119 = vpack.c.b16 %v107, %v106
    %v120 = vpack.c.b16 %v109, %v108
    %v121 = vpack.c.b16 %v111, %v110
    %v122 = vpack.c.b16 %v113, %v112
    %v123 = vpack.c.b16 %v115, %v114
    %v132 = vunpack.c.l.b16 %v41
    %v133 = vunpack.c.l.b16 %v44
    %v134 = vunpack.c.l.b16 %v47
    %v135 = vunpack.c.l.b16 %v50
    %v136 = vunpack.c.l.b16 %v53
    %v137 = vunpack.c.l.b16 %v56
    %v138 = vunpack.c.l.b16 %v59
    %v139 = vunpack.c.l.b16 %v62
    %v140 = vpack.c.b16 %v132, %v132
    %v141 = vpack.c.b16 %v133, %v133
    %v142 = vpack.c.b16 %v134, %v134
    %v143 = vpack.c.b16 %v135, %v135
    %v144 = vpack.c.b16 %v136, %v136
    %v145 = vpack.c.b16 %v137, %v137
    %v146 = vpack.c.b16 %v138, %v138
    %v147 = vpack.c.b16 %v139, %v139
    %vm148 = vsmask.f32 7424
    %v150 = vshrl.u32 %v116, 16
    %v152 = vshll.u32 %v116, 16
    %v154 = vrot.slane %v152, 1
    %v155 = vor.u32 %v150, %v154
    %v157 = vshll.u32 %v140, 16
    %v159 = vrot.slane %v157, 1
    %v160 = vsel %vm148, %v155, %v159
    %v162 = vshrl.u32 %v117, 16
    %v164 = vshll.u32 %v117, 16
    %v166 = vrot.slane %v164, 1
    %v167 = vor.u32 %v162, %v166
    %v169 = vshll.u32 %v141, 16
    %v171 = vrot.slane %v169, 1
    %v172 = vsel %vm148, %v167, %v171
    %v174 = vshrl.u32 %v118, 16
    %v176 = vshll.u32 %v118, 16
    %v178 = vrot.slane %v176, 1
    %v179 = vor.u32 %v174, %v178
    %v181 = vshll.u32 %v142, 16
    %v183 = vrot.slane %v181, 1
    %v184 = vsel %vm148, %v179, %v183
    %v186 = vshrl.u32 %v119, 16
    %v188 = vshll.u32 %v119, 16
    %v190 = vrot.slane %v188, 1
    %v191 = vor.u32 %v186, %v190
    %v193 = vshll.u32 %v143, 16
    %v195 = vrot.slane %v193, 1
    %v196 = vsel %vm148, %v191, %v195
    %v198 = vshrl.u32 %v120, 16
    %v200 = vshll.u32 %v120, 16
    %v202 = vrot.slane %v200, 1
    %v203 = vor.u32 %v198, %v202
    %v205 = vshll.u32 %v144, 16
    %v207 = vrot.slane %v205, 1
    %v208 = vsel %vm148, %v203, %v207
    %v210 = vshrl.u32 %v121, 16
    %v212 = vshll.u32 %v121, 16
    %v214 = vrot.slane %v212, 1
    %v215 = vor.u32 %v210, %v214
    %v217 = vshll.u32 %v145, 16
    %v219 = vrot.slane %v217, 1
    %v220 = vsel %vm148, %v215, %v219
    %v222 = vshrl.u32 %v122, 16
    %v224 = vshll.u32 %v122, 16
    %v226 = vrot.slane %v224, 1
    %v227 = vor.u32 %v222, %v226
    %v229 = vshll.u32 %v146, 16
    %v231 = vrot.slane %v229, 1
    %v232 = vsel %vm148, %v227, %v231
    %v234 = vshrl.u32 %v123, 16
    %v236 = vshll.u32 %v123, 16
    %v238 = vrot.slane %v236, 1
    %v239 = vor.u32 %v234, %v238
    %v241 = vshll.u32 %v147, 16
    %v243 = vrot.slane %v241, 1
    %v244 = vsel %vm148, %v239, %v243
    %245 = vrot.lane.b32.xlu0 %v160, 32
    %v246 = vpop.permute.xlu0 %245
    %247 = vrot.lane.b32.xlu0 %v172, 32
    %v248 = vpop.permute.xlu0 %247
    %249 = vrot.lane.b32.xlu0 %v184, 32
    %v250 = vpop.permute.xlu0 %249
    %251 = vrot.lane.b32.xlu0 %v196, 32
    %v252 = vpop.permute.xlu0 %251
    %253 = vrot.lane.b32.xlu0 %v208, 32
    %v254 = vpop.permute.xlu0 %253
    %255 = vrot.lane.b32.xlu0 %v220, 32
    %v256 = vpop.permute.xlu0 %255
    %257 = vrot.lane.b32.xlu0 %v232, 32
    %v258 = vpop.permute.xlu0 %257
    %259 = vrot.lane.b32.xlu0 %v244, 32
    %v260 = vpop.permute.xlu0 %259
    %vm261 = vcmask 1046528
    %v262 = vrot.slane %v116, 1
    %v263 = vrot.slane %v140, 1
    %v264 = vsel %vm261, %v262, %v263
    %v265 = vrot.slane %v117, 1
    %v266 = vrot.slane %v141, 1
    %v267 = vsel %vm261, %v265, %v266
    %v268 = vrot.slane %v118, 1
    %v269 = vrot.slane %v142, 1
    %v270 = vsel %vm261, %v268, %v269
    %v271 = vrot.slane %v119, 1
    %v272 = vrot.slane %v143, 1
    %v273 = vsel %vm261, %v271, %v272
    %v274 = vrot.slane %v120, 1
    %v275 = vrot.slane %v144, 1
    %v276 = vsel %vm261, %v274, %v275
    %v277 = vrot.slane %v121, 1
    %v278 = vrot.slane %v145, 1
    %v279 = vsel %vm261, %v277, %v278
    %v280 = vrot.slane %v122, 1
    %v281 = vrot.slane %v146, 1
    %v282 = vsel %vm261, %v280, %v281
    %v283 = vrot.slane %v123, 1
    %v284 = vrot.slane %v147, 1
    %v285 = vsel %vm261, %v283, %v284
    %286 = vrot.lane.b32.xlu0 %v264, 64
    %v287 = vpop.permute.xlu0 %286
    %288 = vrot.lane.b32.xlu0 %v267, 64
    %v289 = vpop.permute.xlu0 %288
    %290 = vrot.lane.b32.xlu0 %v270, 64
    %v291 = vpop.permute.xlu0 %290
    %292 = vrot.lane.b32.xlu0 %v273, 64
    %v293 = vpop.permute.xlu0 %292
    %294 = vrot.lane.b32.xlu0 %v276, 64
    %v295 = vpop.permute.xlu0 %294
    %296 = vrot.lane.b32.xlu0 %v279, 64
    %v297 = vpop.permute.xlu0 %296
    %298 = vrot.lane.b32.xlu0 %v282, 64
    %v299 = vpop.permute.xlu0 %298
    %300 = vrot.lane.b32.xlu0 %v285, 64
    %v301 = vpop.permute.xlu0 %300
    %vm302 = vsmask.f32 6400
    %v303 = vrot.slane %v150, 1
    %v304 = vrot.slane %v152, 2
    %v305 = vor.u32 %v303, %v304
    %v306 = vshrl.u32 %v140, 16
    %v308 = vrot.slane %v306, 1
    %v309 = vrot.slane %v157, 2
    %v310 = vor.u32 %v308, %v309
    %v311 = vsel %vm302, %v305, %v310
    %v312 = vrot.slane %v162, 1
    %v313 = vrot.slane %v164, 2
    %v314 = vor.u32 %v312, %v313
    %v315 = vshrl.u32 %v141, 16
    %v317 = vrot.slane %v315, 1
    %v318 = vrot.slane %v169, 2
    %v319 = vor.u32 %v317, %v318
    %v320 = vsel %vm302, %v314, %v319
    %v321 = vrot.slane %v174, 1
    %v322 = vrot.slane %v176, 2
    %v323 = vor.u32 %v321, %v322
    %v324 = vshrl.u32 %v142, 16
    %v326 = vrot.slane %v324, 1
    %v327 = vrot.slane %v181, 2
    %v328 = vor.u32 %v326, %v327
    %v329 = vsel %vm302, %v323, %v328
    %v330 = vrot.slane %v186, 1
    %v331 = vrot.slane %v188, 2
    %v332 = vor.u32 %v330, %v331
    %v333 = vshrl.u32 %v143, 16
    %v335 = vrot.slane %v333, 1
    %v336 = vrot.slane %v193, 2
    %v337 = vor.u32 %v335, %v336
    %v338 = vsel %vm302, %v332, %v337
    %v339 = vrot.slane %v198, 1
    %v340 = vrot.slane %v200, 2
    %v341 = vor.u32 %v339, %v340
    %v342 = vshrl.u32 %v144, 16
    %v344 = vrot.slane %v342, 1
    %v345 = vrot.slane %v205, 2
    %v346 = vor.u32 %v344, %v345
    %v347 = vsel %vm302, %v341, %v346
    %v348 = vrot.slane %v210, 1
    %v349 = vrot.slane %v212, 2
    %v350 = vor.u32 %v348, %v349
    %v351 = vshrl.u32 %v145, 16
    %v353 = vrot.slane %v351, 1
    %v354 = vrot.slane %v217, 2
    %v355 = vor.u32 %v353, %v354
    %v356 = vsel %vm302, %v350, %v355
    %v357 = vrot.slane %v222, 1
    %v358 = vrot.slane %v224, 2
    %v359 = vor.u32 %v357, %v358
    %v360 = vshrl.u32 %v146, 16
    %v362 = vrot.slane %v360, 1
    %v363 = vrot.slane %v229, 2
    %v364 = vor.u32 %v362, %v363
    %v365 = vsel %vm302, %v359, %v364
    %v366 = vrot.slane %v234, 1
    %v367 = vrot.slane %v236, 2
    %v368 = vor.u32 %v366, %v367
    %v369 = vshrl.u32 %v147, 16
    %v371 = vrot.slane %v369, 1
    %v372 = vrot.slane %v241, 2
    %v373 = vor.u32 %v371, %v372
    %v374 = vsel %vm302, %v368, %v373
    %375 = vrot.lane.b32.xlu0 %v311, 96
    %v376 = vpop.permute.xlu0 %375
    %377 = vrot.lane.b32.xlu0 %v320, 96
    %v378 = vpop.permute.xlu0 %377
    %379 = vrot.lane.b32.xlu0 %v329, 96
    %v380 = vpop.permute.xlu0 %379
    %381 = vrot.lane.b32.xlu0 %v338, 96
    %v382 = vpop.permute.xlu0 %381
    %383 = vrot.lane.b32.xlu0 %v347, 96
    %v384 = vpop.permute.xlu0 %383
    %385 = vrot.lane.b32.xlu0 %v356, 96
    %v386 = vpop.permute.xlu0 %385
    %387 = vrot.lane.b32.xlu0 %v365, 96
    %v388 = vpop.permute.xlu0 %387
    %389 = vrot.lane.b32.xlu0 %v374, 96
    %v390 = vpop.permute.xlu0 %389
    %vm391 = vcmask 1045504
    %v392 = vrot.slane %v116, 2
    %v393 = vrot.slane %v140, 2
    %v394 = vsel %vm391, %v392, %v393
    %v395 = vrot.slane %v117, 2
    %v396 = vrot.slane %v141, 2
    %v397 = vsel %vm391, %v395, %v396
    %v398 = vrot.slane %v118, 2
    %v399 = vrot.slane %v142, 2
    %v400 = vsel %vm391, %v398, %v399
    %v401 = vrot.slane %v119, 2
    %v402 = vrot.slane %v143, 2
    %v403 = vsel %vm391, %v401, %v402
    %v404 = vrot.slane %v120, 2
    %v405 = vrot.slane %v144, 2
    %v406 = vsel %vm391, %v404, %v405
    %v407 = vrot.slane %v121, 2
    %v408 = vrot.slane %v145, 2
    %v409 = vsel %vm391, %v407, %v408
    %v410 = vrot.slane %v122, 2
    %v411 = vrot.slane %v146, 2
    %v412 = vsel %vm391, %v410, %v411
    %v413 = vrot.slane %v123, 2
    %v414 = vrot.slane %v147, 2
    %v415 = vsel %vm391, %v413, %v414
    %vm416 = vcmask 261120
    %v418 = vsel %vm416, %v116, %v246
    %v420 = vsel %vm416, %v117, %v248
    %v422 = vsel %vm416, %v118, %v250
    %v424 = vsel %vm416, %v119, %v252
    %v426 = vsel %vm416, %v120, %v254
    %v428 = vsel %vm416, %v121, %v256
    %v430 = vsel %vm416, %v122, %v258
    %v432 = vsel %vm416, %v123, %v260
    %vm433 = vcmask 523264
    %v435 = vsel %vm433, %v418, %v287
    %v437 = vsel %vm433, %v420, %v289
    %v439 = vsel %vm433, %v422, %v291
    %v441 = vsel %vm433, %v424, %v293
    %v443 = vsel %vm433, %v426, %v295
    %v445 = vsel %vm433, %v428, %v297
    %v447 = vsel %vm433, %v430, %v299
    %v449 = vsel %vm433, %v432, %v301
    %vm450 = vcmask 785408
    %v452 = vsel %vm450, %v435, %v376
    %v455 = vsel %vm450, %v437, %v378
    %v458 = vsel %vm450, %v439, %v380
    %v461 = vsel %vm450, %v441, %v382
    %v464 = vsel %vm450, %v443, %v384
    %v467 = vsel %vm450, %v445, %v386
    %v470 = vsel %vm450, %v447, %v388
    %v473 = vsel %vm450, %v449, %v390
    %v495 = vunpack.c.l.b16 %v63
    %v496 = vunpack.c.l.b16 %v64
    %v497 = vunpack.c.l.b16 %v65
    %v498 = vunpack.c.l.b16 %v66
    %v499 = vunpack.c.l.b16 %v67
    %v500 = vunpack.c.l.b16 %v68
    %v501 = vunpack.c.l.b16 %v69
    %v502 = vunpack.c.l.b16 %v70
    %v503 = vunpack.c.l.b16 %v71
    %v504 = vunpack.c.l.b16 %v72
    %v505 = vunpack.c.l.b16 %v73
    %v506 = vunpack.c.l.b16 %v74
    %v507 = vunpack.c.l.b16 %v75
    %v508 = vunpack.c.l.b16 %v76
    %v509 = vunpack.c.l.b16 %v77
    %v510 = vunpack.c.l.b16 %v78
    %v511 = vunpack.c.l.b16 %v79
    %v512 = vunpack.c.l.b16 %v80
    %v513 = vunpack.c.l.b16 %v81
    %v514 = vunpack.c.l.b16 %v82
    %v515 = vpack.c.b16 %v496, %v495
    %v516 = vpack.c.b16 %v498, %v497
    %v517 = vpack.c.b16 %v500, %v499
    %v518 = vpack.c.b16 %v502, %v501
    %v519 = vpack.c.b16 %v504, %v503
    %v520 = vpack.c.b16 %v506, %v505
    %v521 = vpack.c.b16 %v508, %v507
    %v522 = vpack.c.b16 %v510, %v509
    %v523 = vpack.c.b16 %v512, %v511
    %v524 = vpack.c.b16 %v514, %v513
    %v536 = vsel %vm416, %v394, 0
    %v539 = vsel %vm416, %v397, 0
    %v542 = vsel %vm416, %v400, 0
    %v545 = vsel %vm416, %v403, 0
    %v548 = vsel %vm416, %v406, 0
    %v551 = vsel %vm416, %v409, 0
    %v554 = vsel %vm416, %v412, 0
    %v557 = vsel %vm416, %v415, 0
    %559 = vmatprep.subr.bf16.mxu0 0
    %560 = vmatpush1.bf16.msra.mxu0 %v522
    %561 = vmatprep.subr.bf16.mxu0 0
    %562 = vmatpush1.bf16.msra.mxu0 %v521
    %563 = vmatprep.subr.bf16.mxu0 0
    %564 = vmatpush1.bf16.msra.mxu0 %v520
    %565 = vmatprep.subr.bf16.mxu0 0
    %566 = vmatpush1.bf16.msra.mxu0 %v519
    %567 = vmatprep.subr.bf16.mxu0 0
    %568 = vmatpush1.bf16.msra.mxu0 %v518
    %569 = vmatprep.subr.bf16.mxu0 0
    %570 = vmatpush1.bf16.msra.mxu0 %v517
    %571 = vmatprep.subr.bf16.mxu0 0
    %572 = vmatpush1.bf16.msra.mxu0 %v516
    %573 = vmatprep.subr.bf16.mxu0 0
    %574 = vmatpush1.bf16.msra.mxu0 %v515
    %575 = vmatprep.subr.bf16.mxu0 0
    %576 = vmatpush2.bf16.msra.mxu0 0
    %577 = vmatprep.subr.bf16.mxu0 0
    %578 = vmatpush2.bf16.msra.mxu0 0
    %579 = vmatprep.subr.bf16.mxu0 0
    %580 = vmatpush2.bf16.msra.mxu0 0
    %581 = vmatprep.subr.bf16.mxu0 0
    %582 = vmatpush2.bf16.msra.mxu0 0
    %583 = vmatprep.subr.bf16.mxu0 0
    %584 = vmatpush2.bf16.msra.mxu0 0
    %585 = vmatprep.subr.bf16.mxu0 0
    %586 = vmatpush2.bf16.msra.mxu0 0
    %587 = vmatprep.subr.bf16.mxu0 0
    %588 = vmatpush2.bf16.msra.mxu0 %v524
    %589 = vmatprep.subr.bf16.mxu0 0
    %590 = vmatpush2.bf16.msra.mxu0 %v523
    %591 = vmatprep.mubr.bf16.mxu0 %v536
    %592 = vmatmul.mubr.bf16.gmra.mxu0 %v452
    %v593 = vpop.f32.mrf.mxu0
    %v594 = vadd.f32 0.0, %v593
    %v595 = vpop.f32.mrf.mxu0
    %v596 = vpop.f32.mrf.mxu0
    %v597 = vadd.f32 0.0, %v596
    %v598 = vpop.f32.mrf.mxu0
    %599 = vmatprep.mubr.bf16.mxu0 %v539
    %600 = vmatmul.mubr.bf16.gmra.mxu0 %v455
    %v601 = vpop.f32.mrf.mxu0
    %v602 = vadd.f32 0.0, %v601
    %v603 = vpop.f32.mrf.mxu0
    %v604 = vpop.f32.mrf.mxu0
    %v605 = vadd.f32 0.0, %v604
    %v606 = vpop.f32.mrf.mxu0
    %607 = vmatprep.mubr.bf16.mxu0 %v542
    %608 = vmatmul.mubr.bf16.gmra.mxu0 %v458
    %v609 = vpop.f32.mrf.mxu0
    %v610 = vadd.f32 0.0, %v609
    %v611 = vpop.f32.mrf.mxu0
    %v612 = vpop.f32.mrf.mxu0
    %v613 = vadd.f32 0.0, %v612
    %v614 = vpop.f32.mrf.mxu0
    %615 = vmatprep.mubr.bf16.mxu0 %v545
    %616 = vmatmul.mubr.bf16.gmra.mxu0 %v461
    %v617 = vpop.f32.mrf.mxu0
    %v618 = vadd.f32 0.0, %v617
    %v619 = vpop.f32.mrf.mxu0
    %v620 = vpop.f32.mrf.mxu0
    %v621 = vadd.f32 0.0, %v620
    %v622 = vpop.f32.mrf.mxu0
    %623 = vmatprep.mubr.bf16.mxu0 %v548
    %624 = vmatmul.mubr.bf16.gmra.mxu0 %v464
    %v625 = vpop.f32.mrf.mxu0
    %v626 = vadd.f32 0.0, %v625
    %v627 = vpop.f32.mrf.mxu0
    %v628 = vpop.f32.mrf.mxu0
    %v629 = vadd.f32 0.0, %v628
    %v630 = vpop.f32.mrf.mxu0
    %631 = vmatprep.mubr.bf16.mxu0 %v551
    %632 = vmatmul.mubr.bf16.gmra.mxu0 %v467
    %v633 = vpop.f32.mrf.mxu0
    %v634 = vadd.f32 0.0, %v633
    %v635 = vpop.f32.mrf.mxu0
    %v636 = vpop.f32.mrf.mxu0
    %v637 = vadd.f32 0.0, %v636
    %v638 = vpop.f32.mrf.mxu0
    %639 = vmatprep.mubr.bf16.mxu0 %v554
    %640 = vmatmul.mubr.bf16.gmra.mxu0 %v470
    %v641 = vpop.f32.mrf.mxu0
    %v642 = vadd.f32 0.0, %v641
    %v643 = vpop.f32.mrf.mxu0
    %v644 = vpop.f32.mrf.mxu0
    %v645 = vadd.f32 0.0, %v644
    %v646 = vpop.f32.mrf.mxu0
    %647 = vmatprep.mubr.bf16.mxu0 %v557
    %648 = vmatmul.mubr.bf16.gmra.mxu0 %v473
    %v649 = vpop.f32.mrf.mxu0
    %v650 = vadd.f32 0.0, %v649
    %v651 = vpop.f32.mrf.mxu0
    %v652 = vpop.f32.mrf.mxu0
    %v653 = vadd.f32 0.0, %v652
    %v654 = vpop.f32.mrf.mxu0
    %655 = vdwg.mxu0
    %v657 = vlaneseq
    %v658 = vshrl.u32 %v657, 7
    %v659 = vsub.s32 0, %v658
    %v660 = vrot.slane %v83, %v659
    %v662 = vadd.f32 %v594, %v660
    %v663 = vadd.f32 %v597, %v660
    %v664 = vadd.f32 %v602, %v660
    %v665 = vadd.f32 %v605, %v660
    %v666 = vadd.f32 %v610, %v660
    %v667 = vadd.f32 %v613, %v660
    %v668 = vadd.f32 %v618, %v660
    %v669 = vadd.f32 %v621, %v660
    %v670 = vadd.f32 %v626, %v660
    %v671 = vadd.f32 %v629, %v660
    %v672 = vadd.f32 %v634, %v660
    %v673 = vadd.f32 %v637, %v660
    %v674 = vadd.f32 %v642, %v660
    %v675 = vadd.f32 %v645, %v660
    %v676 = vadd.f32 %v650, %v660
    %v677 = vadd.f32 %v653, %v660
    %vm678 = vcmp.ge.f32.partialorder %v662, 0.0
    %vm679 = vcmp.ge.f32.partialorder %v663, 0.0
    %vm680 = vcmp.ge.f32.partialorder %v664, 0.0
    %vm681 = vcmp.ge.f32.partialorder %v665, 0.0
    %vm682 = vcmp.ge.f32.partialorder %v666, 0.0
    %vm683 = vcmp.ge.f32.partialorder %v667, 0.0
    %vm684 = vcmp.ge.f32.partialorder %v668, 0.0
    %vm685 = vcmp.ge.f32.partialorder %v669, 0.0
    %vm686 = vcmp.ge.f32.partialorder %v670, 0.0
    %vm687 = vcmp.ge.f32.partialorder %v671, 0.0
    %vm688 = vcmp.ge.f32.partialorder %v672, 0.0
    %vm689 = vcmp.ge.f32.partialorder %v673, 0.0
    %vm690 = vcmp.ge.f32.partialorder %v674, 0.0
    %vm691 = vcmp.ge.f32.partialorder %v675, 0.0
    %vm692 = vcmp.ge.f32.partialorder %v676, 0.0
    %vm693 = vcmp.ge.f32.partialorder %v677, 0.0
    %v694 = vmul.f32 %v662, 0.01
    %v695 = vmul.f32 %v663, 0.01
    %v696 = vmul.f32 %v664, 0.01
    %v697 = vmul.f32 %v665, 0.01
    %v698 = vmul.f32 %v666, 0.01
    %v699 = vmul.f32 %v667, 0.01
    %v700 = vmul.f32 %v668, 0.01
    %v701 = vmul.f32 %v669, 0.01
    %v702 = vmul.f32 %v670, 0.01
    %v703 = vmul.f32 %v671, 0.01
    %v704 = vmul.f32 %v672, 0.01
    %v705 = vmul.f32 %v673, 0.01
    %v706 = vmul.f32 %v674, 0.01
    %v707 = vmul.f32 %v675, 0.01
    %v708 = vmul.f32 %v676, 0.01
    %v709 = vmul.f32 %v677, 0.01
    %v710 = vsel %vm678, %v662, %v694
    %v711 = vsel %vm679, %v663, %v695
    %v712 = vsel %vm680, %v664, %v696
    %v713 = vsel %vm681, %v665, %v697
    %v714 = vsel %vm682, %v666, %v698
    %v715 = vsel %vm683, %v667, %v699
    %v716 = vsel %vm684, %v668, %v700
    %v717 = vsel %vm685, %v669, %v701
    %v718 = vsel %vm686, %v670, %v702
    %v719 = vsel %vm687, %v671, %v703
    %v720 = vsel %vm688, %v672, %v704
    %v721 = vsel %vm689, %v673, %v705
    %v722 = vsel %vm690, %v674, %v706
    %v723 = vsel %vm691, %v675, %v707
    %v724 = vsel %vm692, %v676, %v708
    %v725 = vsel %vm693, %v677, %v709
    %v726 = vld [vmem:[%s3] sm:$0xff]
    %v727 = vld [vmem:[%s3 + $0x8] sm:$0xff]
    %v728 = vadd.f32 %v710, %v726
    %v729 = vadd.f32 %v711, %v727
    %v730 = vadd.f32 %v712, %v726
    %v731 = vadd.f32 %v713, %v727
    %v732 = vadd.f32 %v714, %v726
    %v733 = vadd.f32 %v715, %v727
    %v734 = vadd.f32 %v716, %v726
    %v735 = vadd.f32 %v717, %v727
    %v736 = vadd.f32 %v718, %v726
    %v737 = vadd.f32 %v719, %v727
    %v738 = vadd.f32 %v720, %v726
    %v739 = vadd.f32 %v721, %v727
    %v740 = vadd.f32 %v722, %v726
    %v741 = vadd.f32 %v723, %v727
    %v742 = vadd.f32 %v724, %v726
    %v743 = vadd.f32 %v725, %v727
    %v744 = vmax.f32 %v728, %v729
    %v745 = vrot.slane %v744, 4
    %v746 = vmax.f32 %v744, %v745
    %v747 = vrot.slane %v746, 2
    %v748 = vmax.f32 %v746, %v747
    %v749 = vrot.slane %v748, 1
    %v750 = vmax.f32 %v748, %v749
    %v751 = vmax.f32 %v730, %v731
    %v752 = vrot.slane %v751, 4
    %v753 = vmax.f32 %v751, %v752
    %v754 = vrot.slane %v753, 2
    %v755 = vmax.f32 %v753, %v754
    %v756 = vrot.slane %v755, 1
    %v757 = vmax.f32 %v755, %v756
    %v758 = vmax.f32 %v732, %v733
    %v759 = vrot.slane %v758, 4
    %v760 = vmax.f32 %v758, %v759
    %v761 = vrot.slane %v760, 2
    %v762 = vmax.f32 %v760, %v761
    %v763 = vrot.slane %v762, 1
    %v764 = vmax.f32 %v762, %v763
    %v765 = vmax.f32 %v734, %v735
    %v766 = vrot.slane %v765, 4
    %v767 = vmax.f32 %v765, %v766
    %v768 = vrot.slane %v767, 2
    %v769 = vmax.f32 %v767, %v768
    %v770 = vrot.slane %v769, 1
    %v771 = vmax.f32 %v769, %v770
    %v772 = vmax.f32 %v736, %v737
    %v773 = vrot.slane %v772, 4
    %v774 = vmax.f32 %v772, %v773
    %v775 = vrot.slane %v774, 2
    %v776 = vmax.f32 %v774, %v775
    %v777 = vrot.slane %v776, 1
    %v778 = vmax.f32 %v776, %v777
    %v779 = vmax.f32 %v738, %v739
    %v780 = vrot.slane %v779, 4
    %v781 = vmax.f32 %v779, %v780
    %v782 = vrot.slane %v781, 2
    %v783 = vmax.f32 %v781, %v782
    %v784 = vrot.slane %v783, 1
    %v785 = vmax.f32 %v783, %v784
    %v786 = vmax.f32 %v740, %v741
    %v787 = vrot.slane %v786, 4
    %v788 = vmax.f32 %v786, %v787
    %v789 = vrot.slane %v788, 2
    %v790 = vmax.f32 %v788, %v789
    %v791 = vrot.slane %v790, 1
    %v792 = vmax.f32 %v790, %v791
    %v793 = vmax.f32 %v742, %v743
    %v794 = vrot.slane %v793, 4
    %v795 = vmax.f32 %v793, %v794
    %v796 = vrot.slane %v795, 2
    %v797 = vmax.f32 %v795, %v796
    %v798 = vrot.slane %v797, 1
    %v799 = vmax.f32 %v797, %v798
    %v800 = vld [vmem:[%s4] sm:$0xff]
    %v801 = vld [vmem:[%s4 + $0x8] sm:$0xff]
    %v802 = vld [vmem:[%s4 + $0x10] sm:$0xff]
    %v803 = vld [vmem:[%s4 + $0x18] sm:$0xff]
    %v804 = vld [vmem:[%s4 + $0x20] sm:$0xff]
    %v805 = vld [vmem:[%s4 + $0x28] sm:$0xff]
    %v806 = vld [vmem:[%s4 + $0x30] sm:$0xff]
    %v807 = vld [vmem:[%s4 + $0x38] sm:$0xff]
    %v808 = vld [vmem:[%s4 + $0x40] sm:$0xff]
    %v809 = vld [vmem:[%s4 + $0x48] sm:$0xff]
    %v810 = vld [vmem:[%s4 + $0x50] sm:$0xff]
    %v811 = vld [vmem:[%s4 + $0x58] sm:$0xff]
    %v812 = vld [vmem:[%s4 + $0x60] sm:$0xff]
    %v813 = vld [vmem:[%s4 + $0x68] sm:$0xff]
    %v814 = vld [vmem:[%s4 + $0x70] sm:$0xff]
    %v815 = vld [vmem:[%s4 + $0x78] sm:$0xff]
    %v816 = vld [vmem:[%s5] sm:$0x1]
    %v818 = vlaneseq
    %v819 = vshrl.u32 %v818, 7
    %v820 = vsub.s32 0, %v819
    %v821 = vrot.slane %v816, %v820
    %vm831 = vcmask 1041409
    %v832 = vsel %vm831, %v757, %v750
    %vm833 = vcmask 1042434
    %v834 = vsel %vm833, %v764, %v832
    %vm835 = vcmask 1043459
    %v836 = vsel %vm835, %v771, %v834
    %vm837 = vcmask 1044484
    %v838 = vsel %vm837, %v778, %v836
    %vm839 = vcmask 1045509
    %v840 = vsel %vm839, %v785, %v838
    %vm841 = vcmask 1046534
    %v842 = vsel %vm841, %v792, %v840
    %vm843 = vcmask 1047559
    %v844 = vsel %vm843, %v799, %v842
    %846 = vmatprep.subr.mxu0 0.0
    %847 = vmatpush1.msra.mxu0 %v815
    %848 = vmatprep.subr.mxu0 0.0
    %849 = vmatpush1.msra.mxu0 %v814
    %850 = vmatprep.subr.mxu0 0.0
    %851 = vmatpush1.msra.mxu0 %v813
    %852 = vmatprep.subr.mxu0 0.0
    %853 = vmatpush1.msra.mxu0 %v812
    %854 = vmatprep.subr.mxu0 0.0
    %855 = vmatpush1.msra.mxu0 %v811
    %856 = vmatprep.subr.mxu0 0.0
    %857 = vmatpush1.msra.mxu0 %v810
    %858 = vmatprep.subr.mxu0 0.0
    %859 = vmatpush1.msra.mxu0 %v809
    %860 = vmatprep.subr.mxu0 0.0
    %861 = vmatpush1.msra.mxu0 %v808
    %862 = vmatprep.subr.mxu0 0.0
    %863 = vmatpush1.msra.mxu0 %v807
    %864 = vmatprep.subr.mxu0 0.0
    %865 = vmatpush1.msra.mxu0 %v806
    %866 = vmatprep.subr.mxu0 0.0
    %867 = vmatpush1.msra.mxu0 %v805
    %868 = vmatprep.subr.mxu0 0.0
    %869 = vmatpush1.msra.mxu0 %v804
    %870 = vmatprep.subr.mxu0 0.0
    %871 = vmatpush1.msra.mxu0 %v803
    %872 = vmatprep.subr.mxu0 0.0
    %873 = vmatpush1.msra.mxu0 %v802
    %874 = vmatprep.subr.mxu0 0.0
    %875 = vmatpush1.msra.mxu0 %v801
    %876 = vmatprep.subr.mxu0 0.0
    %877 = vmatpush1.msra.mxu0 %v800
    %878 = vmatprep.subr.mxu0 0.0
    %879 = vmatpush2.msra.mxu0 0.0
    %880 = vmatprep.subr.mxu0 0.0
    %881 = vmatpush2.msra.mxu0 0.0
    %882 = vmatprep.subr.mxu0 0.0
    %883 = vmatpush2.msra.mxu0 0.0
    %884 = vmatprep.subr.mxu0 0.0
    %885 = vmatpush2.msra.mxu0 0.0
    %886 = vmatprep.subr.mxu0 0.0
    %887 = vmatpush2.msra.mxu0 0.0
    %888 = vmatprep.subr.mxu0 0.0
    %889 = vmatpush2.msra.mxu0 0.0
    %890 = vmatprep.subr.mxu0 0.0
    %891 = vmatpush2.msra.mxu0 0.0
    %892 = vmatprep.subr.mxu0 0.0
    %893 = vmatpush2.msra.mxu0 0.0
    %894 = vmatprep.subr.mxu0 0.0
    %895 = vmatpush2.msra.mxu0 0.0
    %896 = vmatprep.subr.mxu0 0.0
    %897 = vmatpush2.msra.mxu0 0.0
    %898 = vmatprep.subr.mxu0 0.0
    %899 = vmatpush2.msra.mxu0 0.0
    %900 = vmatprep.subr.mxu0 0.0
    %901 = vmatpush2.msra.mxu0 0.0
    %902 = vmatprep.subr.mxu0 0.0
    %903 = vmatpush2.msra.mxu0 0.0
    %904 = vmatprep.subr.mxu0 0.0
    %905 = vmatpush2.msra.mxu0 0.0
    %906 = vmatprep.subr.mxu0 0.0
    %907 = vmatpush2.msra.mxu0 0.0
    %908 = vmatprep.subr.mxu0 0.0
    %909 = vmatpush2.msra.mxu0 0.0
    %910 = vmatprep.mubr.f32.mxu0 0.0
    %911 = vmatmul.mubr.f32.gmra.mxu0 %v844
    %v912 = vpop.f32.mrf.mxu0
    %v913 = vadd.f32 %v821, %v912
    %v914 = vpop.f32.mrf.mxu0
    %915 = vdwg.mxu0
    %v916 = vxor.u32 %v913, 2147483648
    %v917 = vmul.f32 %v916, 1.442695
    %v918 = vpow.pop %v917
    %v919 = vadd.f32 %v918, 1.0
    %v920 = vrcp.pop %v919
    %v921 = vmul.f32 1.0, %v920
    %922 = vst [vmem:[#allocation5] sm:$0xff] %v921
    // Predicated region
    $region30: #{tpu_custom_call.1} parent=1 // pred_check
      _
    $region31: #{tpu_custom_call.1} parent=1 // pred_check_branch
      %924 = sbr.rel (0) target = $region33
    $region32: #{tpu_custom_call.1} parent=1 // pred_region
      %s926 = ssub.s32 128, 128
      %927 = vsyncadd [#allocation4], %s926
      %s929 = sshll.u32 [#allocation5], 4
      %s930 = int_to_ptr.vmem [resolvable:$true] %s929
      %932 = dma.vmem_to_hbm [thread:$0]  %s930, 128, %s6, [#allocation4]
    $region33: #{tpu_custom_call.1} parent=1 // pred_fallthru
      _
    // Predicated region
    $region34: #{tpu_custom_call.1} parent=1 // pred_check
      _
    $region35: #{tpu_custom_call.1} parent=1 // pred_check_branch
      %934 = sbr.rel (0) target = $region37
    $region36: #{tpu_custom_call.1} parent=1 // pred_region
      %935 = dma.done [#allocation4], 128
    $region37: #{tpu_custom_call.1} parent=1 // pred_fallthru
      _
    %936 = vsyncpa [#allocation3], 1
    %937 = vsyncpa [#allocation4], 1

</llo_original>
